<compile_context>
chip_gen: v7x
topology: tpu7x:2x2x1
jax: 0.10.0
libtpu: 0.0.40
codegen_flags: <defaults>
</compile_context>

<pallas_src>
import functools

import jax
import jax.numpy as jnp
from jax import lax
from jax.experimental import pallas as pl
from jax.experimental.pallas import tpu as pltpu


# ----------------------------------------------------------------------------
# Fused per-grid-step kernel (processes `batch_block` images)
# ----------------------------------------------------------------------------
def _make_fused_kernel(H, W, batch_block):
    HW = H * W
    # 3x3 tap offsets in flattened-HW coordinates, tap-major (ky, kx) order.
    offsets = [oy * W + ox for oy in (-1, 0, 1) for ox in (-1, 0, 1)]

    def kernel(x_ref, cimg_ref, mask_ref, wf_ref, wgf_ref, wgw_ref, out_ref):
        m9 = mask_ref[...]            # (9, HW)  f32 boundary masks (hoisted)
        wf = wf_ref[...]              # (2, 72)  bf16 flow-conv weights (+bias @ col 39)
        wgf = wgf_ref[...]            # (4, 72)  bf16 gen-conv weights on [ri|c4|1] slab
        wgw = wgw_ref[...]            # (4, 36)  bf16 gen-conv weights on warped slab

        def im2col(arr):
            # arr: (C, HW) f32 -> (9*C, HW) f32 stacked im2col slab (tap-major).
            pieces = []
            for t, off in enumerate(offsets):
                sh = pltpu.roll(arr, shift=(-off) % HW, axis=1) if off else arr
                pieces.append(sh * m9[t:t + 1])
            return jnp.concatenate(pieces, axis=0)

        for b in range(batch_block):
            x = x_ref[b]                                          # (8, HW)
            ri = x[0:3]                                           # real_image
            ed_bin = (x[7:8] > 0.5).astype(jnp.float32)           # edge binarize
            c4 = x[3:7] * ed_bin                                  # [cloth*e (3), e (1)]

            # ---- stacked im2col slab shared by both convs ------------------
            # rows per tap: [ri(3), c4(4), ones(1)] -> 72 rows; bias rides on
            # the centre-tap ones row.
            f8 = jnp.concatenate([ri, c4, x[6:7]], axis=0)        # (8, HW)
            slab = im2col(f8).astype(jnp.bfloat16)                # (72, HW)

            # ---- flow predictor stand-in: tanh(3x3 conv) -> sampling grid --
            flow = jnp.tanh(jnp.dot(wf, slab,
                                    preferred_element_type=jnp.float32))  # (2, HW)
            sx = (flow[0:1] + 1.0) * (W * 0.5) - 0.5              # x pixel coords
            sy = (flow[1:2] + 1.0) * (H * 0.5) - 0.5              # y pixel coords

            # ---- separable bilinear grid_sample of [cloth | edge] ----------
            # (padding_mode='zeros', align_corners=False); tent weights in f32.
            xs = lax.broadcasted_iota(jnp.int32, (W, 1), 0).astype(jnp.float32)
            ys = lax.broadcasted_iota(jnp.int32, (H, 1), 0).astype(jnp.float32)
            tx = jnp.maximum(0.0, 1.0 - jnp.abs(sx - xs))         # (W, HW)
            ty = jnp.maximum(0.0, 1.0 - jnp.abs(sy - ys))         # (H, HW)

            ci = cimg_ref[b]                                      # (5H, W) image layout
            e_img = (ci[4 * H:5 * H] > 0.5).astype(jnp.float32)   # (H, W)
            c4_hw = ci[0:4 * H] * jnp.tile(e_img, (4, 1))         # (4H, W)

            p = jnp.dot(c4_hw.astype(jnp.bfloat16), tx.astype(jnp.bfloat16),
                        preferred_element_type=jnp.float32)       # (4H, HW)
            warped = jnp.sum(p.reshape(4, H, HW) * ty[None], axis=1)  # (4, HW)
            warped_cloth = warped[0:3]
            warped_edge = warped[3:4]

            # ---- generator stand-in: 3x3 conv over [real, warped_cloth, warped_edge]
            wslab = im2col(warped).astype(jnp.bfloat16)           # (36, HW)
            gen = (jnp.dot(wgf, slab, preferred_element_type=jnp.float32) +
                   jnp.dot(wgw, wslab, preferred_element_type=jnp.float32))  # (4, HW)

            # ---- composite --------------------------------------------------
            p_rendered = jnp.tanh(gen[0:3])
            m = jax.nn.sigmoid(gen[3:4]) * warped_edge
            out_ref[b] = warped_cloth * m + p_rendered * (1.0 - m)

    return kernel


# ----------------------------------------------------------------------------
# Host-side wrapper
# ----------------------------------------------------------------------------
@functools.partial(jax.jit, static_argnames=("batch_block",))
def afwnet_forward(real_image, clothes, edge, flow_w, flow_b, gen_w, gen_b,
                   batch_block=1):
    B, _, H, W = real_image.shape
    HW = H * W
    bblk = batch_block if (batch_block >= 1 and B % batch_block == 0) else 1

    f32 = jnp.float32
    real_image = real_image.astype(f32)
    clothes = clothes.astype(f32)
    edge = edge.astype(f32)
    ones = jnp.ones_like(edge)

    # Lane-flattened packed channels for the convs: [real | clothes | 1 | edge].
    x8 = jnp.concatenate([real_image, clothes, ones, edge], axis=1).reshape(B, 8, HW)
    # Image-layout copy for the separable grid_sample: row blocks
    # [cloth0 | cloth1 | cloth2 | ones | edge], each H rows of W pixels.
    cimg = jnp.concatenate([clothes, ones, edge], axis=1).reshape(B, 5 * H, W)

    # 3x3 boundary masks hoisted out of the kernel (constant index_map input).
    yy = jnp.arange(H)[:, None]
    xx = jnp.arange(W)[None, :]
    mask9 = jnp.stack(
        [((yy + oy >= 0) & (yy + oy < H) & (xx + ox >= 0) & (xx + ox < W))
         .reshape(HW) for oy in (-1, 0, 1) for ox in (-1, 0, 1)]).astype(f32)

    # Stacked (im2col) weight matrices, tap-major.  Slab rows per tap are
    # [real(3), cloth*e(3), e(1), ones(1)]; biases folded onto the centre-tap
    # ones row (column 4*8 + 7 = 39).
    def prep(w):  # (Cout, Cin, 3, 3) -> (9, Cout, Cin), tap-major (ky, kx)
        return jnp.transpose(w.astype(f32), (2, 3, 0, 1)).reshape(
            9, w.shape[0], w.shape[1])

    bias_col = 4 * 8 + 7
    fw9 = prep(flow_w)                                             # (9, 2, 6)
    gw9 = prep(gen_w)                                              # (9, 4, 7)

    wf = jnp.concatenate([fw9[:, :, 0:3], fw9[:, :, 3:6],
                          jnp.zeros((9, 2, 2), f32)], axis=2)      # (9, 2, 8)
    wf = jnp.transpose(wf, (1, 0, 2)).reshape(2, 72)
    wf = wf.at[:, bias_col].set(flow_b.astype(f32))

    wgf = jnp.concatenate([gw9[:, :, 0:3],
                           jnp.zeros((9, 4, 5), f32)], axis=2)     # (9, 4, 8)
    wgf = jnp.transpose(wgf, (1, 0, 2)).reshape(4, 72)
    wgf = wgf.at[:, bias_col].set(gen_b.astype(f32))

    wgw = jnp.transpose(gw9[:, :, 3:7], (1, 0, 2)).reshape(4, 36)  # warped chans

    bf16 = jnp.bfloat16
    wf, wgf, wgw = wf.astype(bf16), wgf.astype(bf16), wgw.astype(bf16)

    out = pl.pallas_call(
        _make_fused_kernel(H, W, bblk),
        out_shape=jax.ShapeDtypeStruct((B, 3, HW), f32),
        grid=(B // bblk,),
        in_specs=[
            pl.BlockSpec((bblk, 8, HW), lambda b: (b, 0, 0)),
            pl.BlockSpec((bblk, 5 * H, W), lambda b: (b, 0, 0)),
            pl.BlockSpec((9, HW), lambda b: (0, 0)),
            pl.BlockSpec((2, 72), lambda b: (0, 0)),
            pl.BlockSpec((4, 72), lambda b: (0, 0)),
            pl.BlockSpec((4, 36), lambda b: (0, 0)),
        ],
        out_specs=pl.BlockSpec((bblk, 3, HW), lambda b: (b, 0, 0)),
        compiler_params=pltpu.CompilerParams(
            dimension_semantics=("parallel",)),   # shard batch across TCs
    )(x8, cimg, mask9, wf, wgf, wgw)

    return out.reshape(B, 3, H, W)


if __name__ == "__main__":
    B, H, W = 2, 16, 16
    key = jax.random.PRNGKey(0)
    k1, k2, k3, kw1, kw2 = jax.random.split(key, 5)

    real_image = jax.random.normal(k1, (B, 3, H, W), jnp.float32)
    clothes = jax.random.normal(k2, (B, 3, H, W), jnp.float32)
    edge = jax.random.uniform(k3, (B, 1, H, W), jnp.float32)

    # Deterministic synthetic parameters for the stand-in sub-networks.
    flow_w = jax.random.normal(kw1, (2, 6, 3, 3), jnp.float32) * 0.1
    flow_b = jnp.zeros((2,), jnp.float32)
    gen_w = jax.random.normal(kw2, (4, 7, 3, 3), jnp.float32) * 0.1
    gen_b = jnp.zeros((4,), jnp.float32)

    # batch_block=1: one image per grid step (megacore-friendly).
    p1 = afwnet_forward(real_image, clothes, edge,
                        flow_w, flow_b, gen_w, gen_b, batch_block=1)
    # batch_block=2: fatter grid steps (amortizes per-step overhead on v5e/v6e).
    p2 = afwnet_forward(real_image, clothes, edge,
                        flow_w, flow_b, gen_w, gen_b, batch_block=2)
    jax.block_until_ready((p1, p2))

    assert p1.shape == (B, 3, H, W)
    assert p2.shape == (B, 3, H, W)
    assert jnp.allclose(p1, p2, atol=1e-5)
    print("KERNEL_OK")
</pallas_src>

<mosaic_0001>
module attributes {stable_mosaic.version = 11 : i64} {
  func.func @kernel(%arg0: i32, %arg1: memref<1x8x256xf32, #tpu.memory_space<vmem>>, %arg2: memref<1x80x16xf32, #tpu.memory_space<vmem>>, %arg3: memref<9x256xf32, #tpu.memory_space<vmem>>, %arg4: memref<2x72xbf16, #tpu.memory_space<vmem>>, %arg5: memref<4x72xbf16, #tpu.memory_space<vmem>>, %arg6: memref<4x36xbf16, #tpu.memory_space<vmem>>, %arg7: memref<1x3x256xf32, #tpu.memory_space<vmem>>) attributes {dimension_semantics = [#tpu.dimension_semantics<parallel>], iteration_bounds = array<i64: 2>, scalar_prefetch = 0 : i64, scratch_operands = 0 : i64, tpu.core_type = #tpu.core_type<tc>, window_params = [{transform_indices = @transform_0, window_bounds = array<i64: 1, 8, 256>}, {transform_indices = @transform_1, window_bounds = array<i64: 1, 80, 16>}, {pipeline_mode = #tpu.pipeline_mode<synchronous>, transform_indices = @transform_2, window_bounds = array<i64: 9, 256>}, {pipeline_mode = #tpu.pipeline_mode<synchronous>, transform_indices = @transform_3, window_bounds = array<i64: 2, 72>}, {pipeline_mode = #tpu.pipeline_mode<synchronous>, transform_indices = @transform_4, window_bounds = array<i64: 4, 72>}, {pipeline_mode = #tpu.pipeline_mode<synchronous>, transform_indices = @transform_5, window_bounds = array<i64: 4, 36>}, {transform_indices = @transform_6, window_bounds = array<i64: 1, 3, 256>}]} {
    %c0 = arith.constant 0 : index
    %c0_0 = arith.constant 0 : index
    %0 = vector.load %arg3[%c0, %c0_0] : memref<9x256xf32, #tpu.memory_space<vmem>>, vector<9x256xf32>
    %c0_1 = arith.constant 0 : index
    %c0_2 = arith.constant 0 : index
    %1 = vector.load %arg4[%c0_1, %c0_2] : memref<2x72xbf16, #tpu.memory_space<vmem>>, vector<2x72xbf16>
    %c0_3 = arith.constant 0 : index
    %c0_4 = arith.constant 0 : index
    %2 = vector.load %arg5[%c0_3, %c0_4] : memref<4x72xbf16, #tpu.memory_space<vmem>>, vector<4x72xbf16>
    %c0_5 = arith.constant 0 : index
    %c0_6 = arith.constant 0 : index
    %3 = vector.load %arg6[%c0_5, %c0_6] : memref<4x36xbf16, #tpu.memory_space<vmem>>, vector<4x36xbf16>
    %c0_7 = arith.constant 0 : index
    %c0_8 = arith.constant 0 : index
    %c0_9 = arith.constant 0 : index
    %4 = vector.load %arg1[%c0_7, %c0_8, %c0_9] : memref<1x8x256xf32, #tpu.memory_space<vmem>>, vector<1x8x256xf32>
    %5 = vector.shape_cast %4 : vector<1x8x256xf32> to vector<8x256xf32>
    %6 = vector.extract_strided_slice %5 {offsets = [0, 0], sizes = [3, 256], strides = [1, 1]} : vector<8x256xf32> to vector<3x256xf32>
    %7 = vector.extract_strided_slice %5 {offsets = [7, 0], sizes = [1, 256], strides = [1, 1]} : vector<8x256xf32> to vector<1x256xf32>
    %cst = arith.constant 5.000000e-01 : f32
    %8 = vector.broadcast %cst : f32 to vector<1x256xf32>
    %9 = arith.cmpf ogt, %7, %8 : vector<1x256xf32>
    %10 = arith.extui %9 : vector<1x256xi1> to vector<1x256xi32>
    %11 = arith.sitofp %10 : vector<1x256xi32> to vector<1x256xf32>
    %12 = vector.extract_strided_slice %5 {offsets = [3, 0], sizes = [4, 256], strides = [1, 1]} : vector<8x256xf32> to vector<4x256xf32>
    %13 = vector.broadcast %11 : vector<1x256xf32> to vector<4x256xf32>
    %14 = arith.mulf %12, %13 : vector<4x256xf32>
    %15 = vector.extract_strided_slice %5 {offsets = [6, 0], sizes = [1, 256], strides = [1, 1]} : vector<8x256xf32> to vector<1x256xf32>
    %16 = tpu.concatenate %6, %14, %15 in 0 : vector<3x256xf32>, vector<4x256xf32>, vector<1x256xf32> -> vector<8x256xf32>
    %c17_i32 = arith.constant 17 : i32
    %17 = tpu.dynamic_rotate %16 by %c17_i32 dim 1 : vector<8x256xf32>, i32 -> vector<8x256xf32>
    %18 = vector.extract_strided_slice %0 {offsets = [0, 0], sizes = [1, 256], strides = [1, 1]} : vector<9x256xf32> to vector<1x256xf32>
    %19 = vector.broadcast %18 : vector<1x256xf32> to vector<8x256xf32>
    %20 = arith.mulf %17, %19 : vector<8x256xf32>
    %c16_i32 = arith.constant 16 : i32
    %21 = tpu.dynamic_rotate %16 by %c16_i32 dim 1 : vector<8x256xf32>, i32 -> vector<8x256xf32>
    %22 = vector.extract_strided_slice %0 {offsets = [1, 0], sizes = [1, 256], strides = [1, 1]} : vector<9x256xf32> to vector<1x256xf32>
    %23 = vector.broadcast %22 : vector<1x256xf32> to vector<8x256xf32>
    %24 = arith.mulf %21, %23 : vector<8x256xf32>
    %c15_i32 = arith.constant 15 : i32
    %25 = tpu.dynamic_rotate %16 by %c15_i32 dim 1 : vector<8x256xf32>, i32 -> vector<8x256xf32>
    %26 = vector.extract_strided_slice %0 {offsets = [2, 0], sizes = [1, 256], strides = [1, 1]} : vector<9x256xf32> to vector<1x256xf32>
    %27 = vector.broadcast %26 : vector<1x256xf32> to vector<8x256xf32>
    %28 = arith.mulf %25, %27 : vector<8x256xf32>
    %c1_i32 = arith.constant 1 : i32
    %29 = tpu.dynamic_rotate %16 by %c1_i32 dim 1 : vector<8x256xf32>, i32 -> vector<8x256xf32>
    %30 = vector.extract_strided_slice %0 {offsets = [3, 0], sizes = [1, 256], strides = [1, 1]} : vector<9x256xf32> to vector<1x256xf32>
    %31 = vector.broadcast %30 : vector<1x256xf32> to vector<8x256xf32>
    %32 = arith.mulf %29, %31 : vector<8x256xf32>
    %33 = vector.extract_strided_slice %0 {offsets = [4, 0], sizes = [1, 256], strides = [1, 1]} : vector<9x256xf32> to vector<1x256xf32>
    %34 = vector.broadcast %33 : vector<1x256xf32> to vector<8x256xf32>
    %35 = arith.mulf %16, %34 : vector<8x256xf32>
    %c255_i32 = arith.constant 255 : i32
    %36 = tpu.dynamic_rotate %16 by %c255_i32 dim 1 : vector<8x256xf32>, i32 -> vector<8x256xf32>
    %37 = vector.extract_strided_slice %0 {offsets = [5, 0], sizes = [1, 256], strides = [1, 1]} : vector<9x256xf32> to vector<1x256xf32>
    %38 = vector.broadcast %37 : vector<1x256xf32> to vector<8x256xf32>
    %39 = arith.mulf %36, %38 : vector<8x256xf32>
    %c241_i32 = arith.constant 241 : i32
    %40 = tpu.dynamic_rotate %16 by %c241_i32 dim 1 : vector<8x256xf32>, i32 -> vector<8x256xf32>
    %41 = vector.extract_strided_slice %0 {offsets = [6, 0], sizes = [1, 256], strides = [1, 1]} : vector<9x256xf32> to vector<1x256xf32>
    %42 = vector.broadcast %41 : vector<1x256xf32> to vector<8x256xf32>
    %43 = arith.mulf %40, %42 : vector<8x256xf32>
    %c240_i32 = arith.constant 240 : i32
    %44 = tpu.dynamic_rotate %16 by %c240_i32 dim 1 : vector<8x256xf32>, i32 -> vector<8x256xf32>
    %45 = vector.extract_strided_slice %0 {offsets = [7, 0], sizes = [1, 256], strides = [1, 1]} : vector<9x256xf32> to vector<1x256xf32>
    %46 = vector.broadcast %45 : vector<1x256xf32> to vector<8x256xf32>
    %47 = arith.mulf %44, %46 : vector<8x256xf32>
    %c239_i32 = arith.constant 239 : i32
    %48 = tpu.dynamic_rotate %16 by %c239_i32 dim 1 : vector<8x256xf32>, i32 -> vector<8x256xf32>
    %49 = vector.extract_strided_slice %0 {offsets = [8, 0], sizes = [1, 256], strides = [1, 1]} : vector<9x256xf32> to vector<1x256xf32>
    %50 = vector.broadcast %49 : vector<1x256xf32> to vector<8x256xf32>
    %51 = arith.mulf %48, %50 : vector<8x256xf32>
    %52 = tpu.concatenate %20, %24, %28, %32, %35, %39, %43, %47, %51 in 0 : vector<8x256xf32>, vector<8x256xf32>, vector<8x256xf32>, vector<8x256xf32>, vector<8x256xf32>, vector<8x256xf32>, vector<8x256xf32>, vector<8x256xf32>, vector<8x256xf32> -> vector<72x256xf32>
    %53 = arith.truncf %52 : vector<72x256xf32> to vector<72x256xbf16>
    %cst_10 = arith.constant dense<0.000000e+00> : vector<2x256xf32>
    %54 = tpu.matmul %1, %53, %cst_10 {dimension_numbers = #tpu.dot_dimension_numbers<[1], [0], [0], [1], [0, 0, 1, 1], [], []>} : vector<2x72xbf16>, vector<72x256xbf16>, vector<2x256xf32> -> vector<2x256xf32>
    %55 = math.tanh %54 : vector<2x256xf32>
    %56 = vector.extract_strided_slice %55 {offsets = [0, 0], sizes = [1, 256], strides = [1, 1]} : vector<2x256xf32> to vector<1x256xf32>
    %cst_11 = arith.constant 1.000000e+00 : f32
    %57 = vector.broadcast %cst_11 : f32 to vector<1x256xf32>
    %58 = arith.addf %56, %57 : vector<1x256xf32>
    %cst_12 = arith.constant 8.000000e+00 : f32
    %59 = vector.broadcast %cst_12 : f32 to vector<1x256xf32>
    %60 = arith.mulf %58, %59 : vector<1x256xf32>
    %cst_13 = arith.constant 5.000000e-01 : f32
    %61 = vector.broadcast %cst_13 : f32 to vector<1x256xf32>
    %62 = arith.subf %60, %61 : vector<1x256xf32>
    %63 = vector.extract_strided_slice %55 {offsets = [1, 0], sizes = [1, 256], strides = [1, 1]} : vector<2x256xf32> to vector<1x256xf32>
    %cst_14 = arith.constant 1.000000e+00 : f32
    %64 = vector.broadcast %cst_14 : f32 to vector<1x256xf32>
    %65 = arith.addf %63, %64 : vector<1x256xf32>
    %cst_15 = arith.constant 8.000000e+00 : f32
    %66 = vector.broadcast %cst_15 : f32 to vector<1x256xf32>
    %67 = arith.mulf %65, %66 : vector<1x256xf32>
    %cst_16 = arith.constant 5.000000e-01 : f32
    %68 = vector.broadcast %cst_16 : f32 to vector<1x256xf32>
    %69 = arith.subf %67, %68 : vector<1x256xf32>
    %70 = tpu.iota {dimensions = array<i32: 0>} : vector<16x1xi32>
    %71 = arith.sitofp %70 : vector<16x1xi32> to vector<16x1xf32>
    %72 = tpu.iota {dimensions = array<i32: 0>} : vector<16x1xi32>
    %73 = arith.sitofp %72 : vector<16x1xi32> to vector<16x1xf32>
    %74 = vector.broadcast %62 : vector<1x256xf32> to vector<16x256xf32>
    %75 = vector.broadcast %71 : vector<16x1xf32> to vector<16x256xf32>
    %76 = arith.subf %74, %75 : vector<16x256xf32>
    %77 = math.absf %76 : vector<16x256xf32>
    %cst_17 = arith.constant 1.000000e+00 : f32
    %78 = vector.broadcast %cst_17 : f32 to vector<16x256xf32>
    %79 = arith.subf %78, %77 : vector<16x256xf32>
    %cst_18 = arith.constant 0.000000e+00 : f32
    %80 = vector.broadcast %cst_18 : f32 to vector<16x256xf32>
    %81 = arith.maximumf %80, %79 : vector<16x256xf32>
    %82 = vector.broadcast %69 : vector<1x256xf32> to vector<16x256xf32>
    %83 = vector.broadcast %73 : vector<16x1xf32> to vector<16x256xf32>
    %84 = arith.subf %82, %83 : vector<16x256xf32>
    %85 = math.absf %84 : vector<16x256xf32>
    %cst_19 = arith.constant 1.000000e+00 : f32
    %86 = vector.broadcast %cst_19 : f32 to vector<16x256xf32>
    %87 = arith.subf %86, %85 : vector<16x256xf32>
    %cst_20 = arith.constant 0.000000e+00 : f32
    %88 = vector.broadcast %cst_20 : f32 to vector<16x256xf32>
    %89 = arith.maximumf %88, %87 : vector<16x256xf32>
    %c0_21 = arith.constant 0 : index
    %c0_22 = arith.constant 0 : index
    %c0_23 = arith.constant 0 : index
    %90 = vector.load %arg2[%c0_21, %c0_22, %c0_23] : memref<1x80x16xf32, #tpu.memory_space<vmem>>, vector<1x80x16xf32>
    %91 = vector.shape_cast %90 : vector<1x80x16xf32> to vector<80x16xf32>
    %92 = vector.extract_strided_slice %91 {offsets = [64, 0], sizes = [16, 16], strides = [1, 1]} : vector<80x16xf32> to vector<16x16xf32>
    %cst_24 = arith.constant 5.000000e-01 : f32
    %93 = vector.broadcast %cst_24 : f32 to vector<16x16xf32>
    %94 = arith.cmpf ogt, %92, %93 : vector<16x16xf32>
    %95 = arith.extui %94 : vector<16x16xi1> to vector<16x16xi32>
    %96 = arith.sitofp %95 : vector<16x16xi32> to vector<16x16xf32>
    %97 = vector.extract_strided_slice %91 {offsets = [0, 0], sizes = [64, 16], strides = [1, 1]} : vector<80x16xf32> to vector<64x16xf32>
    %98 = tpu.concatenate %96, %96, %96, %96 in 0 : vector<16x16xf32>, vector<16x16xf32>, vector<16x16xf32>, vector<16x16xf32> -> vector<64x16xf32>
    %99 = arith.mulf %97, %98 : vector<64x16xf32>
    %100 = arith.truncf %99 : vector<64x16xf32> to vector<64x16xbf16>
    %101 = arith.truncf %81 : vector<16x256xf32> to vector<16x256xbf16>
    %cst_25 = arith.constant dense<0.000000e+00> : vector<64x256xf32>
    %102 = tpu.matmul %100, %101, %cst_25 {dimension_numbers = #tpu.dot_dimension_numbers<[1], [0], [0], [1], [0, 0, 1, 1], [], []>} : vector<64x16xbf16>, vector<16x256xbf16>, vector<64x256xf32> -> vector<64x256xf32>
    %103 = vector.shape_cast %102 : vector<64x256xf32> to vector<4x16x256xf32>
    %104 = vector.shape_cast %89 : vector<16x256xf32> to vector<1x16x256xf32>
    %105 = vector.broadcast %104 : vector<1x16x256xf32> to vector<4x16x256xf32>
    %106 = arith.mulf %103, %105 : vector<4x16x256xf32>
    %cst_26 = arith.constant dense<0.000000e+00> : vector<4x256xf32>
    %107 = vector.multi_reduction <add>, %106, %cst_26 [1] : vector<4x16x256xf32> to vector<4x256xf32>
    %108 = vector.extract_strided_slice %107 {offsets = [0, 0], sizes = [3, 256], strides = [1, 1]} : vector<4x256xf32> to vector<3x256xf32>
    %109 = vector.extract_strided_slice %107 {offsets = [3, 0], sizes = [1, 256], strides = [1, 1]} : vector<4x256xf32> to vector<1x256xf32>
    %c17_i32_27 = arith.constant 17 : i32
    %110 = tpu.dynamic_rotate %107 by %c17_i32_27 dim 1 : vector<4x256xf32>, i32 -> vector<4x256xf32>
    %111 = vector.extract_strided_slice %0 {offsets = [0, 0], sizes = [1, 256], strides = [1, 1]} : vector<9x256xf32> to vector<1x256xf32>
    %112 = vector.broadcast %111 : vector<1x256xf32> to vector<4x256xf32>
    %113 = arith.mulf %110, %112 : vector<4x256xf32>
    %c16_i32_28 = arith.constant 16 : i32
    %114 = tpu.dynamic_rotate %107 by %c16_i32_28 dim 1 : vector<4x256xf32>, i32 -> vector<4x256xf32>
    %115 = vector.extract_strided_slice %0 {offsets = [1, 0], sizes = [1, 256], strides = [1, 1]} : vector<9x256xf32> to vector<1x256xf32>
    %116 = vector.broadcast %115 : vector<1x256xf32> to vector<4x256xf32>
    %117 = arith.mulf %114, %116 : vector<4x256xf32>
    %c15_i32_29 = arith.constant 15 : i32
    %118 = tpu.dynamic_rotate %107 by %c15_i32_29 dim 1 : vector<4x256xf32>, i32 -> vector<4x256xf32>
    %119 = vector.extract_strided_slice %0 {offsets = [2, 0], sizes = [1, 256], strides = [1, 1]} : vector<9x256xf32> to vector<1x256xf32>
    %120 = vector.broadcast %119 : vector<1x256xf32> to vector<4x256xf32>
    %121 = arith.mulf %118, %120 : vector<4x256xf32>
    %c1_i32_30 = arith.constant 1 : i32
    %122 = tpu.dynamic_rotate %107 by %c1_i32_30 dim 1 : vector<4x256xf32>, i32 -> vector<4x256xf32>
    %123 = vector.extract_strided_slice %0 {offsets = [3, 0], sizes = [1, 256], strides = [1, 1]} : vector<9x256xf32> to vector<1x256xf32>
    %124 = vector.broadcast %123 : vector<1x256xf32> to vector<4x256xf32>
    %125 = arith.mulf %122, %124 : vector<4x256xf32>
    %126 = vector.extract_strided_slice %0 {offsets = [4, 0], sizes = [1, 256], strides = [1, 1]} : vector<9x256xf32> to vector<1x256xf32>
    %127 = vector.broadcast %126 : vector<1x256xf32> to vector<4x256xf32>
    %128 = arith.mulf %107, %127 : vector<4x256xf32>
    %c255_i32_31 = arith.constant 255 : i32
    %129 = tpu.dynamic_rotate %107 by %c255_i32_31 dim 1 : vector<4x256xf32>, i32 -> vector<4x256xf32>
    %130 = vector.extract_strided_slice %0 {offsets = [5, 0], sizes = [1, 256], strides = [1, 1]} : vector<9x256xf32> to vector<1x256xf32>
    %131 = vector.broadcast %130 : vector<1x256xf32> to vector<4x256xf32>
    %132 = arith.mulf %129, %131 : vector<4x256xf32>
    %c241_i32_32 = arith.constant 241 : i32
    %133 = tpu.dynamic_rotate %107 by %c241_i32_32 dim 1 : vector<4x256xf32>, i32 -> vector<4x256xf32>
    %134 = vector.extract_strided_slice %0 {offsets = [6, 0], sizes = [1, 256], strides = [1, 1]} : vector<9x256xf32> to vector<1x256xf32>
    %135 = vector.broadcast %134 : vector<1x256xf32> to vector<4x256xf32>
    %136 = arith.mulf %133, %135 : vector<4x256xf32>
    %c240_i32_33 = arith.constant 240 : i32
    %137 = tpu.dynamic_rotate %107 by %c240_i32_33 dim 1 : vector<4x256xf32>, i32 -> vector<4x256xf32>
    %138 = vector.extract_strided_slice %0 {offsets = [7, 0], sizes = [1, 256], strides = [1, 1]} : vector<9x256xf32> to vector<1x256xf32>
    %139 = vector.broadcast %138 : vector<1x256xf32> to vector<4x256xf32>
    %140 = arith.mulf %137, %139 : vector<4x256xf32>
    %c239_i32_34 = arith.constant 239 : i32
    %141 = tpu.dynamic_rotate %107 by %c239_i32_34 dim 1 : vector<4x256xf32>, i32 -> vector<4x256xf32>
    %142 = vector.extract_strided_slice %0 {offsets = [8, 0], sizes = [1, 256], strides = [1, 1]} : vector<9x256xf32> to vector<1x256xf32>
    %143 = vector.broadcast %142 : vector<1x256xf32> to vector<4x256xf32>
    %144 = arith.mulf %141, %143 : vector<4x256xf32>
    %145 = tpu.concatenate %113, %117, %121, %125, %128, %132, %136, %140, %144 in 0 : vector<4x256xf32>, vector<4x256xf32>, vector<4x256xf32>, vector<4x256xf32>, vector<4x256xf32>, vector<4x256xf32>, vector<4x256xf32>, vector<4x256xf32>, vector<4x256xf32> -> vector<36x256xf32>
    %146 = arith.truncf %145 : vector<36x256xf32> to vector<36x256xbf16>
    %cst_35 = arith.constant dense<0.000000e+00> : vector<4x256xf32>
    %147 = tpu.matmul %2, %53, %cst_35 {dimension_numbers = #tpu.dot_dimension_numbers<[1], [0], [0], [1], [0, 0, 1, 1], [], []>} : vector<4x72xbf16>, vector<72x256xbf16>, vector<4x256xf32> -> vector<4x256xf32>
    %cst_36 = arith.constant dense<0.000000e+00> : vector<4x256xf32>
    %148 = tpu.matmul %3, %146, %cst_36 {dimension_numbers = #tpu.dot_dimension_numbers<[1], [0], [0], [1], [0, 0, 1, 1], [], []>} : vector<4x36xbf16>, vector<36x256xbf16>, vector<4x256xf32> -> vector<4x256xf32>
    %149 = arith.addf %147, %148 : vector<4x256xf32>
    %150 = vector.extract_strided_slice %149 {offsets = [0, 0], sizes = [3, 256], strides = [1, 1]} : vector<4x256xf32> to vector<3x256xf32>
    %151 = math.tanh %150 : vector<3x256xf32>
    %152 = vector.extract_strided_slice %149 {offsets = [3, 0], sizes = [1, 256], strides = [1, 1]} : vector<4x256xf32> to vector<1x256xf32>
    %153 = arith.negf %152 : vector<1x256xf32>
    %154 = math.exp %153 : vector<1x256xf32>
    %cst_37 = arith.constant 1.000000e+00 : f32
    %155 = vector.broadcast %cst_37 : f32 to vector<1x256xf32>
    %156 = arith.addf %155, %154 : vector<1x256xf32>
    %157 = arith.divf %155, %156 : vector<1x256xf32>
    %158 = arith.mulf %157, %109 : vector<1x256xf32>
    %159 = vector.broadcast %158 : vector<1x256xf32> to vector<3x256xf32>
    %160 = arith.mulf %108, %159 : vector<3x256xf32>
    %cst_38 = arith.constant 1.000000e+00 : f32
    %161 = vector.broadcast %cst_38 : f32 to vector<1x256xf32>
    %162 = arith.subf %161, %158 : vector<1x256xf32>
    %163 = vector.broadcast %162 : vector<1x256xf32> to vector<3x256xf32>
    %164 = arith.mulf %151, %163 : vector<3x256xf32>
    %165 = arith.addf %160, %164 : vector<3x256xf32>
    %c0_39 = arith.constant 0 : index
    %c0_40 = arith.constant 0 : index
    %c0_41 = arith.constant 0 : index
    %166 = vector.load %arg7[%c0_39, %c0_40, %c0_41] : memref<1x3x256xf32, #tpu.memory_space<vmem>>, vector<1x3x256xf32>
    %167 = vector.shape_cast %166 : vector<1x3x256xf32> to vector<3x256xf32>
    %168 = vector.shape_cast %165 : vector<3x256xf32> to vector<1x3x256xf32>
    tpu.vector_store %arg7[%c0_39, %c0_40, %c0_41], %168 {strides = array<i32>} : memref<1x3x256xf32, #tpu.memory_space<vmem>>, vector<1x3x256xf32>,
    return
  }
  func.func @transform_0(%arg0: i32) -> (i32, i32, i32) {
    %c0_i32 = arith.constant 0 : i32
    %c0_i32_0 = arith.constant 0 : i32
    %c0_i32_1 = arith.constant 0 : i32
    return %arg0, %c0_i32, %c0_i32_0 : i32, i32, i32
  }
  func.func @transform_1(%arg0: i32) -> (i32, i32, i32) {
    %c0_i32 = arith.constant 0 : i32
    %c0_i32_0 = arith.constant 0 : i32
    %c0_i32_1 = arith.constant 0 : i32
    return %arg0, %c0_i32, %c0_i32_0 : i32, i32, i32
  }
  func.func @transform_2(%arg0: i32) -> (i32, i32) {
    %c0_i32 = arith.constant 0 : i32
    %c0_i32_0 = arith.constant 0 : i32
    %c0_i32_1 = arith.constant 0 : i32
    return %c0_i32, %c0_i32_0 : i32, i32
  }
  func.func @transform_3(%arg0: i32) -> (i32, i32) {
    %c0_i32 = arith.constant 0 : i32
    %c0_i32_0 = arith.constant 0 : i32
    %c0_i32_1 = arith.constant 0 : i32
    return %c0_i32, %c0_i32_0 : i32, i32
  }
  func.func @transform_4(%arg0: i32) -> (i32, i32) {
    %c0_i32 = arith.constant 0 : i32
    %c0_i32_0 = arith.constant 0 : i32
    %c0_i32_1 = arith.constant 0 : i32
    return %c0_i32, %c0_i32_0 : i32, i32
  }
  func.func @transform_5(%arg0: i32) -> (i32, i32) {
    %c0_i32 = arith.constant 0 : i32
    %c0_i32_0 = arith.constant 0 : i32
    %c0_i32_1 = arith.constant 0 : i32
    return %c0_i32, %c0_i32_0 : i32, i32
  }
  func.func @transform_6(%arg0: i32) -> (i32, i32, i32) {
    %c0_i32 = arith.constant 0 : i32
    %c0_i32_0 = arith.constant 0 : i32
    %c0_i32_1 = arith.constant 0 : i32
    return %arg0, %c0_i32, %c0_i32_0 : i32, i32, i32
  }
}

</mosaic_0001>

<llo_original>
// kernel: afwnet_forward.1
$region0: #{afwnet_forward.1}
  #allocation0 [shape = 'u32[]', space=smem, size = 0x4, offset = 0x4, fixed_abs, tag = 'smem constant byte address 0x4 - core index']
  #allocation1 [shape = 'u32[144,128]{1,0:T(1,128)}', space=vmem, size = 0x12000, scoped, tag = 'internal scratch']
  %s0 = inlined_call_operand.vmem [shape: f32[2,8,256], index: 0, kind: input, shape index: {}]
  %s1 = inlined_call_operand.vmem [shape: f32[2,80,16], index: 1, kind: input, shape index: {}]
  %s2 = inlined_call_operand.vmem [shape: f32[9,256], index: 2, kind: input, shape index: {}]
  %s3 = inlined_call_operand.vmem [shape: bf16[2,72], index: 3, kind: input, shape index: {}]
  %s4 = inlined_call_operand.vmem [shape: bf16[4,72], index: 4, kind: input, shape index: {}]
  %s5 = inlined_call_operand.vmem [shape: bf16[4,36], index: 5, kind: input, shape index: {}]
  %s6 = inlined_call_operand.vmem [shape: f32[2,3,256], index: 6, kind: output, shape index: {}]
  %s7 = sld [smem:[#allocation0]]
  $region57: #{afwnet_forward.1} parent=0
    _
  %s9 = ssub.s32 1, %s7
  %s10 = scalar_select 0, %s9, %s7
  loop: start=0, step=1, limit=4
  $region2: #{afwnet_forward.1} parent=0 // loop_pre_header
    _
  $region3: #{afwnet_forward.1} parent=0 // loop_header
    %s12 = sphi 0, %s16
    %p13 = scmp.ge.s32.totalorder %s12, 4
    %s22 = sphi 0, %s24
    %s25 = sphi 0, %s22
    %s26 = sphi 0, %s25
    %s42 = sphi 0, %s26
    %s48 = sphi 0, %s50
    %s51 = sphi 0, %s48
    %s52 = sphi 0, %s51
    %s68 = sphi 0, %s52
    %s72 = sphi 0, %s72
    %s74 = sphi 0, %s72
    %s75 = sphi 0, %s74
    %s89 = sphi 0, %s75
    %s93 = sphi 0, %s93
    %s95 = sphi 0, %s93
    %s96 = sphi 0, %s95
    %s110 = sphi 0, %s96
    %s114 = sphi 0, %s114
    %s116 = sphi 0, %s114
    %s117 = sphi 0, %s116
    %s131 = sphi 0, %s117
    %s135 = sphi 0, %s135
    %s137 = sphi 0, %s135
    %s138 = sphi 0, %s137
    %s152 = sphi 0, %s138
    %s158 = sphi 0, %s160
    %s161 = sphi 0, %s158
    %s162 = sphi 0, %s161
    %s178 = sphi 0, %s162
  $region4: #{afwnet_forward.1} parent=0 // loop_header_branch
    %15 = sbr.rel (%p13) target = $region8
  $region5: #{afwnet_forward.1} parent=0 // loop_body
    %s17 = ssub.s32 %s12, 1
    %s18 = ssub.s32 %s12, 2
    %s19 = sadd.s32 %s12, 1
    %s20 = ssub.s32 %s12, %s19
    %p21 = scmp.eq.s32.totalorder %s20, 0
    %s23 = sadd.s32 %s22, 1
    %s24 = scalar_select %p21, %s22, %s23
    %p27 = pneg %p21
    %p28 = scmp.eq.s32.totalorder %s12, 1
    %p29 = por %p27, %p28
    %p30 = scmp.ne.s32.totalorder %s22, %s25
    %p31 = scmp.eq.s32.totalorder %s12, 0
    %p32 = por %p30, %p31
    %p33 = scmp.ne.s32.totalorder %s22, %s25
    %p34 = scmp.eq.s32.totalorder %s17, 1
    %p35 = por %p33, %p34
    %p36 = scmp.ne.s32.totalorder %s25, %s26
    %p37 = scmp.eq.s32.totalorder %s17, 0
    %p38 = por %p36, %p37
    %p39 = scmp.ne.s32.totalorder %s25, %s26
    %p40 = scmp.eq.s32.totalorder %s18, 1
    %p41 = por %p39, %p40
    %p43 = scmp.ne.s32.totalorder %s26, %s42
    %p44 = scmp.eq.s32.totalorder %s18, 0
    %p45 = por %p43, %p44
    %s46 = ssub.s32 %s12, %s19
    %p47 = scmp.eq.s32.totalorder %s46, 0
    %s49 = sadd.s32 %s48, 1
    %s50 = scalar_select %p47, %s48, %s49
    %p53 = pneg %p47
    %p54 = scmp.eq.s32.totalorder %s12, 1
    %p55 = por %p53, %p54
    %p56 = scmp.ne.s32.totalorder %s48, %s51
    %p57 = scmp.eq.s32.totalorder %s12, 0
    %p58 = por %p56, %p57
    %p59 = scmp.ne.s32.totalorder %s48, %s51
    %p60 = scmp.eq.s32.totalorder %s17, 1
    %p61 = por %p59, %p60
    %p62 = scmp.ne.s32.totalorder %s51, %s52
    %p63 = scmp.eq.s32.totalorder %s17, 0
    %p64 = por %p62, %p63
    %p65 = scmp.ne.s32.totalorder %s51, %s52
    %p66 = scmp.eq.s32.totalorder %s18, 1
    %p67 = por %p65, %p66
    %p69 = scmp.ne.s32.totalorder %s52, %s68
    %p70 = scmp.eq.s32.totalorder %s18, 0
    %p71 = por %p69, %p70
    %s73 = sadd.s32 %s72, 1
    %p76 = scmp.eq.s32.totalorder %s12, 1
    %p77 = scmp.ne.s32.totalorder %s72, %s74
    %p78 = scmp.eq.s32.totalorder %s12, 0
    %p79 = por %p77, %p78
    %p80 = scmp.ne.s32.totalorder %s72, %s74
    %p81 = scmp.eq.s32.totalorder %s17, 1
    %p82 = por %p80, %p81
    %p83 = scmp.ne.s32.totalorder %s74, %s75
    %p84 = scmp.eq.s32.totalorder %s17, 0
    %p85 = por %p83, %p84
    %p86 = scmp.ne.s32.totalorder %s74, %s75
    %p87 = scmp.eq.s32.totalorder %s18, 1
    %p88 = por %p86, %p87
    %p90 = scmp.ne.s32.totalorder %s75, %s89
    %p91 = scmp.eq.s32.totalorder %s18, 0
    %p92 = por %p90, %p91
    %s94 = sadd.s32 %s93, 1
    %p97 = scmp.eq.s32.totalorder %s12, 1
    %p98 = scmp.ne.s32.totalorder %s93, %s95
    %p99 = scmp.eq.s32.totalorder %s12, 0
    %p100 = por %p98, %p99
    %p101 = scmp.ne.s32.totalorder %s93, %s95
    %p102 = scmp.eq.s32.totalorder %s17, 1
    %p103 = por %p101, %p102
    %p104 = scmp.ne.s32.totalorder %s95, %s96
    %p105 = scmp.eq.s32.totalorder %s17, 0
    %p106 = por %p104, %p105
    %p107 = scmp.ne.s32.totalorder %s95, %s96
    %p108 = scmp.eq.s32.totalorder %s18, 1
    %p109 = por %p107, %p108
    %p111 = scmp.ne.s32.totalorder %s96, %s110
    %p112 = scmp.eq.s32.totalorder %s18, 0
    %p113 = por %p111, %p112
    %s115 = sadd.s32 %s114, 1
    %p118 = scmp.eq.s32.totalorder %s12, 1
    %p119 = scmp.ne.s32.totalorder %s114, %s116
    %p120 = scmp.eq.s32.totalorder %s12, 0
    %p121 = por %p119, %p120
    %p122 = scmp.ne.s32.totalorder %s114, %s116
    %p123 = scmp.eq.s32.totalorder %s17, 1
    %p124 = por %p122, %p123
    %p125 = scmp.ne.s32.totalorder %s116, %s117
    %p126 = scmp.eq.s32.totalorder %s17, 0
    %p127 = por %p125, %p126
    %p128 = scmp.ne.s32.totalorder %s116, %s117
    %p129 = scmp.eq.s32.totalorder %s18, 1
    %p130 = por %p128, %p129
    %p132 = scmp.ne.s32.totalorder %s117, %s131
    %p133 = scmp.eq.s32.totalorder %s18, 0
    %p134 = por %p132, %p133
    %s136 = sadd.s32 %s135, 1
    %p139 = scmp.eq.s32.totalorder %s12, 1
    %p140 = scmp.ne.s32.totalorder %s135, %s137
    %p141 = scmp.eq.s32.totalorder %s12, 0
    %p142 = por %p140, %p141
    %p143 = scmp.ne.s32.totalorder %s135, %s137
    %p144 = scmp.eq.s32.totalorder %s17, 1
    %p145 = por %p143, %p144
    %p146 = scmp.ne.s32.totalorder %s137, %s138
    %p147 = scmp.eq.s32.totalorder %s17, 0
    %p148 = por %p146, %p147
    %p149 = scmp.ne.s32.totalorder %s137, %s138
    %p150 = scmp.eq.s32.totalorder %s18, 1
    %p151 = por %p149, %p150
    %p153 = scmp.ne.s32.totalorder %s138, %s152
    %p154 = scmp.eq.s32.totalorder %s18, 0
    %p155 = por %p153, %p154
    %s156 = ssub.s32 %s12, %s19
    %p157 = scmp.eq.s32.totalorder %s156, 0
    %s159 = sadd.s32 %s158, 1
    %s160 = scalar_select %p157, %s158, %s159
    %p163 = pneg %p157
    %p164 = scmp.eq.s32.totalorder %s12, 1
    %p165 = por %p163, %p164
    %p166 = scmp.ne.s32.totalorder %s158, %s161
    %p167 = scmp.eq.s32.totalorder %s12, 0
    %p168 = por %p166, %p167
    %p169 = scmp.ne.s32.totalorder %s158, %s161
    %p170 = scmp.eq.s32.totalorder %s17, 1
    %p171 = por %p169, %p170
    %p172 = scmp.ne.s32.totalorder %s161, %s162
    %p173 = scmp.eq.s32.totalorder %s17, 0
    %p174 = por %p172, %p173
    %p175 = scmp.ne.s32.totalorder %s161, %s162
    %p176 = scmp.eq.s32.totalorder %s18, 1
    %p177 = por %p175, %p176
    %p179 = scmp.ne.s32.totalorder %s162, %s178
    %p180 = scmp.eq.s32.totalorder %s18, 0
    %p181 = por %p179, %p180
    %p182 = scmp.le.s32.totalorder 1, %s12
    %p183 = scmp.lt.s32.totalorder %s12, 3
    %p184 = pnand %p182, %p183
    %p185 = pneg %p184
    // Predicated region
    $region9: #{afwnet_forward.1} parent=5 // pred_check
      _
    $region10: #{afwnet_forward.1} parent=5 // pred_check_branch
      %187 = sbr.rel (%p184) target = $region12
    $region11: #{afwnet_forward.1} parent=5 // pred_region
      %s188 = ssub.s32 %s12, 1
      // Predicated region
      $region13: #{afwnet_forward.1} parent=11 // pred_check
        %p189 = pneg %p85
      $region14: #{afwnet_forward.1} parent=11 // pred_check_branch
        %191 = sbr.rel (%p189) target = $region16
      $region15: #{afwnet_forward.1} parent=11 // pred_region
        _
      $region16: #{afwnet_forward.1} parent=11 // pred_fallthru
        _
      // Predicated region
      $region17: #{afwnet_forward.1} parent=11 // pred_check
        %p192 = pneg %p106
      $region18: #{afwnet_forward.1} parent=11 // pred_check_branch
        %194 = sbr.rel (%p192) target = $region20
      $region19: #{afwnet_forward.1} parent=11 // pred_region
        _
      $region20: #{afwnet_forward.1} parent=11 // pred_fallthru
        _
      // Predicated region
      $region21: #{afwnet_forward.1} parent=11 // pred_check
        %p195 = pneg %p127
      $region22: #{afwnet_forward.1} parent=11 // pred_check_branch
        %197 = sbr.rel (%p195) target = $region24
      $region23: #{afwnet_forward.1} parent=11 // pred_region
        _
      $region24: #{afwnet_forward.1} parent=11 // pred_fallthru
        _
      // Predicated region
      $region25: #{afwnet_forward.1} parent=11 // pred_check
        %p198 = pneg %p148
      $region26: #{afwnet_forward.1} parent=11 // pred_check_branch
        %200 = sbr.rel (%p198) target = $region28
      $region27: #{afwnet_forward.1} parent=11 // pred_region
        _
      $region28: #{afwnet_forward.1} parent=11 // pred_fallthru
        _
    $region12: #{afwnet_forward.1} parent=5 // pred_fallthru
      _
    %p201 = scmp.lt.s32.totalorder %s12, 2
    // Predicated region
    $region29: #{afwnet_forward.1} parent=5 // pred_check
      %p202 = pneg %p201
    $region30: #{afwnet_forward.1} parent=5 // pred_check_branch
      %204 = sbr.rel (%p202) target = $region32
    $region31: #{afwnet_forward.1} parent=5 // pred_region
      // Predicated region
      $region33: #{afwnet_forward.1} parent=31 // pred_check
        %p205 = pneg %p32
      $region34: #{afwnet_forward.1} parent=31 // pred_check_branch
        %207 = sbr.rel (%p205) target = $region36
      $region35: #{afwnet_forward.1} parent=31 // pred_region
        %p208 = scmp.lt.s32.totalorder %s12, 1
        %s209 = scalar_select %p208, %s12, 1
        %s210 = smul.addr %s209, 2
        %s211 = smul.addr %s210, 8
        %s212 = scalar_lea.vmem %s0, %s211
      $region36: #{afwnet_forward.1} parent=31 // pred_fallthru
        _
      // Predicated region
      $region37: #{afwnet_forward.1} parent=31 // pred_check
        %p213 = pneg %p58
      $region38: #{afwnet_forward.1} parent=31 // pred_check_branch
        %215 = sbr.rel (%p213) target = $region40
      $region39: #{afwnet_forward.1} parent=31 // pred_region
        %p216 = scmp.lt.s32.totalorder %s12, 1
        %s217 = scalar_select %p216, %s12, 1
        %s218 = smul.addr %s217, 10
        %s219 = smul.addr %s218, 8
        %s220 = scalar_lea.vmem %s1, %s219
      $region40: #{afwnet_forward.1} parent=31 // pred_fallthru
        _
    $region32: #{afwnet_forward.1} parent=5 // pred_fallthru
      _
    %p221 = scmp.le.s32.totalorder 1, %s12
    %p222 = scmp.lt.s32.totalorder %s12, 3
    %p223 = pnand %p221, %p222
    %p224 = pneg %p223
    // Predicated region
    $region41: #{afwnet_forward.1} parent=5 // pred_check
      _
    $region42: #{afwnet_forward.1} parent=5 // pred_check_branch
      %226 = sbr.rel (%p223) target = $region44
    $region43: #{afwnet_forward.1} parent=5 // pred_region
      %s227 = ssub.s32 %s12, 1
      %p228 = scmp.lt.s32.totalorder %s17, 1
      %s229 = scalar_select %p228, %s17, 1
      %s230 = smul.addr %s229, 2
      %s231 = smul.addr %s230, 8
      %s232 = scalar_lea.vmem %s0, %s231
      %p233 = pneg %p38
      %p234 = pneg %p35
      %p235 = scmp.lt.s32.totalorder %s17, 1
      %s236 = scalar_select %p235, %s17, 1
      %s237 = smul.addr %s236, 10
      %s238 = smul.addr %s237, 8
      %s239 = scalar_lea.vmem %s1, %s238
      %p240 = pneg %p64
      %p241 = pneg %p61
      %p242 = pneg %p85
      %p243 = pneg %p82
      %p244 = pneg %p106
      %p245 = pneg %p103
      %p246 = pneg %p127
      %p247 = pneg %p124
      %p248 = pneg %p148
      %p249 = pneg %p145
      %p250 = pneg %p174
      %p251 = pneg %p171
      %p252 = scmp.lt.s32.totalorder %s17, 1
      %s253 = scalar_select %p252, %s17, 1
      %s254 = smul.addr %s253, 2
      %s255 = smul.addr %s254, 4
      %s256 = scalar_lea.vmem %s6, %s255
      %p257 = scmp.lt.s32.totalorder %s17, 1
      %s258 = scalar_select %p257, %s17, 1
      %s259 = smul.addr %s258, 2
      %s260 = smul.addr %s259, 8
      %s261 = scalar_lea.vmem %s0, %s260
      %p262 = scmp.lt.s32.totalorder %s17, 1
      %s263 = scalar_select %p262, %s17, 1
      %s264 = smul.addr %s263, 10
      %s265 = smul.addr %s264, 8
      %s266 = scalar_lea.vmem %s1, %s265
      %p267 = scmp.lt.s32.totalorder %s17, 1
      %s268 = scalar_select %p267, %s17, 1
      %s269 = smul.addr %s268, 2
      %s270 = smul.addr %s269, 4
      %s271 = scalar_lea.vmem %s6, %s270
      %v273 = vld [vmem:[%s2] sm:$0xff]
      %v274 = vld [vmem:[%s2 + $0x8] sm:$0xff]
      %v275 = vld [vmem:[%s2 + $0x10] sm:$0x1]
      %v276 = vld [vmem:[%s2 + $0x18] sm:$0x1]
      %v277 = vld [vmem:[%s3] sm:$0x1]
      %v278 = vld [vmem:[%s4] sm:$0x3]
      %v279 = vld [vmem:[%s5] sm:$0x3]
      %v280 = vld [vmem:[%s261] sm:$0xff]
      %v281 = vld [vmem:[%s261 + $0x8] sm:$0xff]
      %vm282 = vcmp.gt.f32.partialorder %v280, 0.5
      %vm283 = vcmp.gt.f32.partialorder %v281, 0.5
      %v284 = vsel %vm282, 1, 0
      %v285 = vsel %vm283, 1, 0
      %v286 = vcvt.s32.f32 %v284
      %v287 = vcvt.s32.f32 %v285
      %v288 = vlaneseq
      %v289 = vshrl.u32 %v288, 7
      %v290 = vsub.s32 7, %v289
      %v291 = vrot.slane %v286, %v290
      %v292 = vlaneseq
      %v293 = vshrl.u32 %v292, 7
      %v294 = vsub.s32 7, %v293
      %v295 = vrot.slane %v287, %v294
      %v296 = vmul.f32 %v280, %v291
      %v297 = vmul.f32 %v281, %v295
      %v300 = vrot.slane %v280, 7
      %v301 = vrot.slane %v281, 7
      %vm304 = vcmask 1042432
      %v305 = vsel %vm304, %v280, %v296
      %v306 = vsel %vm304, %v281, %v297
      %vm307 = vcmask 1046528
      %v308 = vsel %vm307, %v305, %v300
      %v309 = vsel %vm307, %v306, %v301
      %310 = vrot.lane.b32.xlu0 %v308, 17
      %v311 = vpop.permute.xlu0 %310
      %312 = vrot.lane.b32.xlu0 %v309, 17
      %v313 = vpop.permute.xlu0 %312
      %v314 = vlaneseq
      %v315 = vand.u32 %v314, 127
      %vm316 = vcmp.lt.s32.totalorder %v315, 17
      %v317 = vsel %vm316, %v311, %v313
      %v318 = vsel %vm316, %v313, %v311
      %v319 = vlaneseq
      %v320 = vshrl.u32 %v319, 7
      %v321 = vsub.s32 0, %v320
      %v322 = vrot.slane %v273, %v321
      %v323 = vlaneseq
      %v324 = vshrl.u32 %v323, 7
      %v325 = vsub.s32 0, %v324
      %v326 = vrot.slane %v274, %v325
      %v327 = vmul.f32 %v318, %v322
      %v328 = vmul.f32 %v317, %v326
      %329 = vrot.lane.b32.xlu0 %v308, 16
      %v330 = vpop.permute.xlu0 %329
      %331 = vrot.lane.b32.xlu0 %v309, 16
      %v332 = vpop.permute.xlu0 %331
      %vm333 = vcmp.lt.s32.totalorder %v315, 16
      %v334 = vsel %vm333, %v330, %v332
      %v335 = vsel %vm333, %v332, %v330
      %v336 = vlaneseq
      %v337 = vshrl.u32 %v336, 7
      %v338 = vsub.s32 1, %v337
      %v339 = vrot.slane %v273, %v338
      %v340 = vlaneseq
      %v341 = vshrl.u32 %v340, 7
      %v342 = vsub.s32 1, %v341
      %v343 = vrot.slane %v274, %v342
      %v344 = vmul.f32 %v335, %v339
      %v345 = vmul.f32 %v334, %v343
      %346 = vrot.lane.b32.xlu0 %v308, 15
      %v347 = vpop.permute.xlu0 %346
      %348 = vrot.lane.b32.xlu0 %v309, 15
      %v349 = vpop.permute.xlu0 %348
      %vm350 = vcmp.lt.s32.totalorder %v315, 15
      %v351 = vsel %vm350, %v347, %v349
      %v352 = vsel %vm350, %v349, %v347
      %v353 = vlaneseq
      %v354 = vshrl.u32 %v353, 7
      %v355 = vsub.s32 2, %v354
      %v356 = vrot.slane %v273, %v355
      %v357 = vlaneseq
      %v358 = vshrl.u32 %v357, 7
      %v359 = vsub.s32 2, %v358
      %v360 = vrot.slane %v274, %v359
      %v361 = vmul.f32 %v352, %v356
      %v362 = vmul.f32 %v351, %v360
      %363 = vrot.lane.b32.xlu0 %v308, 1
      %v364 = vpop.permute.xlu0 %363
      %365 = vrot.lane.b32.xlu0 %v309, 1
      %v366 = vpop.permute.xlu0 %365
      %vm367 = vcmp.lt.s32.totalorder %v315, 1
      %v368 = vsel %vm367, %v364, %v366
      %v369 = vsel %vm367, %v366, %v364
      %v370 = vlaneseq
      %v371 = vshrl.u32 %v370, 7
      %v372 = vsub.s32 3, %v371
      %v373 = vrot.slane %v273, %v372
      %v374 = vlaneseq
      %v375 = vshrl.u32 %v374, 7
      %v376 = vsub.s32 3, %v375
      %v377 = vrot.slane %v274, %v376
      %v378 = vmul.f32 %v369, %v373
      %v379 = vmul.f32 %v368, %v377
      %v380 = vlaneseq
      %v381 = vshrl.u32 %v380, 7
      %v382 = vsub.s32 4, %v381
      %v383 = vrot.slane %v273, %v382
      %v384 = vlaneseq
      %v385 = vshrl.u32 %v384, 7
      %v386 = vsub.s32 4, %v385
      %v387 = vrot.slane %v274, %v386
      %v388 = vmul.f32 %v308, %v383
      %v389 = vmul.f32 %v309, %v387
      %390 = vrot.lane.b32.xlu0 %v308, 127
      %v391 = vpop.permute.xlu0 %390
      %392 = vrot.lane.b32.xlu0 %v309, 127
      %v393 = vpop.permute.xlu0 %392
      %vm394 = vcmp.lt.s32.totalorder %v315, 127
      %v395 = vsel %vm394, %v391, %v393
      %v396 = vsel %vm394, %v393, %v391
      %v397 = vlaneseq
      %v398 = vshrl.u32 %v397, 7
      %v399 = vsub.s32 5, %v398
      %v400 = vrot.slane %v273, %v399
      %v401 = vlaneseq
      %v402 = vshrl.u32 %v401, 7
      %v403 = vsub.s32 5, %v402
      %v404 = vrot.slane %v274, %v403
      %v405 = vmul.f32 %v395, %v400
      %v406 = vmul.f32 %v396, %v404
      %407 = vrot.lane.b32.xlu0 %v308, 113
      %v408 = vpop.permute.xlu0 %407
      %409 = vrot.lane.b32.xlu0 %v309, 113
      %v410 = vpop.permute.xlu0 %409
      %vm411 = vcmp.lt.s32.totalorder %v315, 113
      %v412 = vsel %vm411, %v408, %v410
      %v413 = vsel %vm411, %v410, %v408
      %v414 = vlaneseq
      %v415 = vshrl.u32 %v414, 7
      %v416 = vsub.s32 6, %v415
      %v417 = vrot.slane %v273, %v416
      %v418 = vlaneseq
      %v419 = vshrl.u32 %v418, 7
      %v420 = vsub.s32 6, %v419
      %v421 = vrot.slane %v274, %v420
      %v422 = vmul.f32 %v412, %v417
      %v423 = vmul.f32 %v413, %v421
      %424 = vrot.lane.b32.xlu0 %v308, 112
      %v425 = vpop.permute.xlu0 %424
      %426 = vrot.lane.b32.xlu0 %v309, 112
      %v427 = vpop.permute.xlu0 %426
      %vm428 = vcmp.lt.s32.totalorder %v315, 112
      %v429 = vsel %vm428, %v425, %v427
      %v430 = vsel %vm428, %v427, %v425
      %v431 = vlaneseq
      %v432 = vshrl.u32 %v431, 7
      %v433 = vsub.s32 7, %v432
      %v434 = vrot.slane %v273, %v433
      %v435 = vlaneseq
      %v436 = vshrl.u32 %v435, 7
      %v437 = vsub.s32 7, %v436
      %v438 = vrot.slane %v274, %v437
      %v439 = vmul.f32 %v429, %v434
      %v440 = vmul.f32 %v430, %v438
      %441 = vrot.lane.b32.xlu0 %v308, 111
      %v442 = vpop.permute.xlu0 %441
      %443 = vrot.lane.b32.xlu0 %v309, 111
      %v444 = vpop.permute.xlu0 %443
      %vm445 = vcmp.lt.s32.totalorder %v315, 111
      %v446 = vsel %vm445, %v442, %v444
      %v447 = vsel %vm445, %v444, %v442
      %v448 = vlaneseq
      %v449 = vshrl.u32 %v448, 7
      %v450 = vsub.s32 0, %v449
      %v451 = vrot.slane %v275, %v450
      %v452 = vlaneseq
      %v453 = vshrl.u32 %v452, 7
      %v454 = vsub.s32 0, %v453
      %v455 = vrot.slane %v276, %v454
      %v456 = vmul.f32 %v446, %v451
      %v457 = vmul.f32 %v447, %v455
      %v458 = vpack.c.bf16 %v344, %v327
      %v459 = vpack.c.bf16 %v345, %v328
      %v460 = vpack.c.bf16 %v378, %v361
      %v461 = vpack.c.bf16 %v379, %v362
      %v462 = vpack.c.bf16 %v405, %v388
      %v463 = vpack.c.bf16 %v406, %v389
      %v464 = vpack.c.bf16 %v439, %v422
      %v465 = vpack.c.bf16 %v440, %v423
      %v466 = vpack.c.bf16 %v456, %v456
      %v467 = vpack.c.bf16 %v457, %v457
      %vm468 = vcmask 588800
      %v470 = vsel %vm468, %v277, 0
      %vm472 = vcmask 1043456
      %v474 = vsel %vm472, %v466, 0
      %v477 = vsel %vm472, %v467, 0
      %479 = vmatprep.subr.bf16.mxu0 %v459
      %480 = vmatpush1.bf16.msra.mxu0 %v458
      %481 = vmatprep.subr.bf16.mxu0 %v461
      %482 = vmatpush1.bf16.msra.mxu0 %v460
      %483 = vmatprep.subr.bf16.mxu0 %v463
      %484 = vmatpush1.bf16.msra.mxu0 %v462
      %485 = vmatprep.subr.bf16.mxu0 %v465
      %486 = vmatpush1.bf16.msra.mxu0 %v464
      %487 = vmatprep.subr.bf16.mxu0 %v477
      %488 = vmatpush1.bf16.msra.mxu0 %v474
      %489 = vmatprep.subr.bf16.mxu0 0
      %490 = vmatpush1.bf16.msra.mxu0 0
      %491 = vmatprep.subr.bf16.mxu0 0
      %492 = vmatpush1.bf16.msra.mxu0 0
      %493 = vmatprep.subr.bf16.mxu0 0
      %494 = vmatpush1.bf16.msra.mxu0 0
      %495 = vmatprep.subr.bf16.mxu0 0
      %496 = vmatpush1.bf16.msra.mxu0 0
      %497 = vmatprep.subr.bf16.mxu0 0
      %498 = vmatpush1.bf16.msra.mxu0 0
      %499 = vmatprep.subr.bf16.mxu0 0
      %500 = vmatpush1.bf16.msra.mxu0 0
      %501 = vmatprep.subr.bf16.mxu0 0
      %502 = vmatpush1.bf16.msra.mxu0 0
      %503 = vmatprep.subr.bf16.mxu0 0
      %504 = vmatpush1.bf16.msra.mxu0 0
      %505 = vmatprep.subr.bf16.mxu0 0
      %506 = vmatpush1.bf16.msra.mxu0 0
      %507 = vmatprep.subr.bf16.mxu0 0
      %508 = vmatpush1.bf16.msra.mxu0 0
      %509 = vmatprep.subr.bf16.mxu0 0
      %510 = vmatpush1.bf16.msra.mxu0 0
      %511 = vmatprep.mubr.bf16.mxu0 0
      %512 = vmatmul.mubr.bf16.gmra.mrb[0].mxu0 %v470
      %v513 = vpop.f32.mrb[0].mxu0
      %v514 = vadd.f32 0.0, %v513
      %v515 = vpop.f32.mrb[0].mxu0
      %v516 = vadd.f32 0.0, %v515
      %v517 = vpop.f32.mrb[0].mxu0
      %v518 = vpop.f32.mrb[0].mxu0
      %519 = vdwg.mxu0
      %v520 = vtanh.pop %v514
      %v521 = vtanh.pop %v516
      %v522 = vadd.f32 %v520, 1.0
      %v523 = vadd.f32 %v521, 1.0
      %v524 = vmul.f32 %v522, 8.0
      %v525 = vmul.f32 %v523, 8.0
      %v526 = vsub.f32 %v524, 0.5
      %v527 = vsub.f32 %v525, 0.5
      %v528 = vlaneseq
      %v529 = vshrl.u32 %v528, 7
      %v530 = vadd.s32 %v529, 8
      %v531 = vcvt.s32.f32 %v529
      %v532 = vcvt.s32.f32 %v530
      %v533 = vlaneseq
      %v534 = vshrl.u32 %v533, 7
      %v535 = vsub.s32 0, %v534
      %v536 = vrot.slane %v526, %v535
      %v537 = vlaneseq
      %v538 = vshrl.u32 %v537, 7
      %v539 = vsub.s32 0, %v538
      %v540 = vrot.slane %v527, %v539
      %v541 = vsub.f32 %v536, %v531
      %v542 = vsub.f32 %v540, %v531
      %v543 = vsub.f32 %v536, %v532
      %v544 = vsub.f32 %v540, %v532
      %v545 = vand.u32 2147483647, %v541
      %v546 = vand.u32 2147483647, %v542
      %v547 = vand.u32 2147483647, %v543
      %v548 = vand.u32 2147483647, %v544
      %v549 = vsub.f32 1.0, %v545
      %v550 = vsub.f32 1.0, %v546
      %v551 = vsub.f32 1.0, %v547
      %v552 = vsub.f32 1.0, %v548
      %v553 = vmax.f32 %v549, 0.0
      %v554 = vmax.f32 %v550, 0.0
      %v555 = vmax.f32 %v551, 0.0
      %v556 = vmax.f32 %v552, 0.0
      %v557 = vlaneseq
      %v558 = vshrl.u32 %v557, 7
      %v559 = vsub.s32 1, %v558
      %v560 = vrot.slane %v526, %v559
      %v561 = vlaneseq
      %v562 = vshrl.u32 %v561, 7
      %v563 = vsub.s32 1, %v562
      %v564 = vrot.slane %v527, %v563
      %v565 = vsub.f32 %v560, %v531
      %v566 = vsub.f32 %v564, %v531
      %v567 = vsub.f32 %v560, %v532
      %v568 = vsub.f32 %v564, %v532
      %v569 = vand.u32 2147483647, %v565
      %v570 = vand.u32 2147483647, %v566
      %v571 = vand.u32 2147483647, %v567
      %v572 = vand.u32 2147483647, %v568
      %v573 = vsub.f32 1.0, %v569
      %v574 = vsub.f32 1.0, %v570
      %v575 = vsub.f32 1.0, %v571
      %v576 = vsub.f32 1.0, %v572
      %v577 = vmax.f32 %v573, 0.0
      %v578 = vmax.f32 %v574, 0.0
      %v579 = vmax.f32 %v575, 0.0
      %v580 = vmax.f32 %v576, 0.0
      %v581 = vld [vmem:[%s266] sm:$0xff]
      %v582 = vld [vmem:[%s266 + $0x8] sm:$0xff]
      %v583 = vld [vmem:[%s266 + $0x10] sm:$0xff]
      %v584 = vld [vmem:[%s266 + $0x18] sm:$0xff]
      %v585 = vld [vmem:[%s266 + $0x20] sm:$0xff]
      %v586 = vld [vmem:[%s266 + $0x28] sm:$0xff]
      %v587 = vld [vmem:[%s266 + $0x30] sm:$0xff]
      %v588 = vld [vmem:[%s266 + $0x38] sm:$0xff]
      %v589 = vld [vmem:[%s266 + $0x40] sm:$0xff]
      %v590 = vld [vmem:[%s266 + $0x48] sm:$0xff]
      %vm591 = vcmp.gt.f32.partialorder %v589, 0.5
      %vm592 = vcmp.gt.f32.partialorder %v590, 0.5
      %v593 = vsel %vm591, 1, 0
      %v594 = vsel %vm592, 1, 0
      %v595 = vcvt.s32.f32 %v593
      %v596 = vcvt.s32.f32 %v594
      %v597 = vmul.f32 %v581, %v595
      %v598 = vmul.f32 %v582, %v596
      %v599 = vmul.f32 %v583, %v595
      %v600 = vmul.f32 %v584, %v596
      %v601 = vmul.f32 %v585, %v595
      %v602 = vmul.f32 %v586, %v596
      %v603 = vmul.f32 %v587, %v595
      %v604 = vmul.f32 %v588, %v596
      %v605 = vpack.c.bf16 %v598, %v597
      %v606 = vpack.c.bf16 %v600, %v599
      %v607 = vpack.c.bf16 %v602, %v601
      %v608 = vpack.c.bf16 %v604, %v603
      %v609 = vpack.c.bf16 %v555, %v553
      %v610 = vpack.c.bf16 %v556, %v554
      %vm611 = vcmask 130048
      %v613 = vsel %vm611, %v605, 0
      %v616 = vsel %vm611, %v606, 0
      %v619 = vsel %vm611, %v607, 0
      %v622 = vsel %vm611, %v608, 0
      %624 = vmatprep.subr.bf16.mxu0 %v610
      %625 = vmatpush1.bf16.msra.mxu0 %v609
      %626 = vmatprep.subr.bf16.mxu0 0
      %627 = vmatpush1.bf16.msra.mxu0 0
      %628 = vmatprep.subr.bf16.mxu0 0
      %629 = vmatpush1.bf16.msra.mxu0 0
      %630 = vmatprep.subr.bf16.mxu0 0
      %631 = vmatpush1.bf16.msra.mxu0 0
      %632 = vmatprep.subr.bf16.mxu0 0
      %633 = vmatpush1.bf16.msra.mxu0 0
      %634 = vmatprep.subr.bf16.mxu0 0
      %635 = vmatpush1.bf16.msra.mxu0 0
      %636 = vmatprep.subr.bf16.mxu0 0
      %637 = vmatpush1.bf16.msra.mxu0 0
      %638 = vmatprep.subr.bf16.mxu0 0
      %639 = vmatpush1.bf16.msra.mxu0 0
      %640 = vmatprep.subr.bf16.mxu0 0
      %641 = vmatpush1.bf16.msra.mxu0 0
      %642 = vmatprep.subr.bf16.mxu0 0
      %643 = vmatpush1.bf16.msra.mxu0 0
      %644 = vmatprep.subr.bf16.mxu0 0
      %645 = vmatpush1.bf16.msra.mxu0 0
      %646 = vmatprep.subr.bf16.mxu0 0
      %647 = vmatpush1.bf16.msra.mxu0 0
      %648 = vmatprep.subr.bf16.mxu0 0
      %649 = vmatpush1.bf16.msra.mxu0 0
      %650 = vmatprep.subr.bf16.mxu0 0
      %651 = vmatpush1.bf16.msra.mxu0 0
      %652 = vmatprep.subr.bf16.mxu0 0
      %653 = vmatpush1.bf16.msra.mxu0 0
      %654 = vmatprep.subr.bf16.mxu0 0
      %655 = vmatpush1.bf16.msra.mxu0 0
      %656 = vmatprep.mubr.bf16.mxu0 0
      %657 = vmatmul.mubr.bf16.gmra.mrb[0].mxu0 %v613
      %v658 = vpop.f32.mrb[0].mxu0
      %v659 = vadd.f32 0.0, %v658
      %v660 = vpop.f32.mrb[0].mxu0
      %v661 = vadd.f32 0.0, %v660
      %v662 = vpop.f32.mrb[0].mxu0
      %v663 = vadd.f32 0.0, %v662
      %v664 = vpop.f32.mrb[0].mxu0
      %v665 = vadd.f32 0.0, %v664
      %666 = vmatprep.mubr.bf16.mxu0 0
      %667 = vmatmul.mubr.bf16.gmra.mrb[0].mxu0 %v616
      %v668 = vpop.f32.mrb[0].mxu0
      %v669 = vadd.f32 0.0, %v668
      %v670 = vpop.f32.mrb[0].mxu0
      %v671 = vadd.f32 0.0, %v670
      %v672 = vpop.f32.mrb[0].mxu0
      %v673 = vadd.f32 0.0, %v672
      %v674 = vpop.f32.mrb[0].mxu0
      %v675 = vadd.f32 0.0, %v674
      %676 = vmatprep.mubr.bf16.mxu0 0
      %677 = vmatmul.mubr.bf16.gmra.mrb[0].mxu0 %v619
      %v678 = vpop.f32.mrb[0].mxu0
      %v679 = vadd.f32 0.0, %v678
      %v680 = vpop.f32.mrb[0].mxu0
      %v681 = vadd.f32 0.0, %v680
      %v682 = vpop.f32.mrb[0].mxu0
      %v683 = vadd.f32 0.0, %v682
      %v684 = vpop.f32.mrb[0].mxu0
      %v685 = vadd.f32 0.0, %v684
      %686 = vmatprep.mubr.bf16.mxu0 0
      %687 = vmatmul.mubr.bf16.gmra.mrb[0].mxu0 %v622
      %v688 = vpop.f32.mrb[0].mxu0
      %v689 = vadd.f32 0.0, %v688
      %v690 = vpop.f32.mrb[0].mxu0
      %v691 = vadd.f32 0.0, %v690
      %v692 = vpop.f32.mrb[0].mxu0
      %v693 = vadd.f32 0.0, %v692
      %v694 = vpop.f32.mrb[0].mxu0
      %v695 = vadd.f32 0.0, %v694
      %696 = vdwg.mxu0
      %v697 = vmul.f32 %v659, %v577
      %v698 = vmul.f32 %v661, %v578
      %v699 = vmul.f32 %v663, %v579
      %v700 = vmul.f32 %v665, %v580
      %v701 = vmul.f32 %v669, %v577
      %v702 = vmul.f32 %v671, %v578
      %v703 = vmul.f32 %v673, %v579
      %v704 = vmul.f32 %v675, %v580
      %v705 = vmul.f32 %v679, %v577
      %v706 = vmul.f32 %v681, %v578
      %v707 = vmul.f32 %v683, %v579
      %v708 = vmul.f32 %v685, %v580
      %v709 = vmul.f32 %v689, %v577
      %v710 = vmul.f32 %v691, %v578
      %v711 = vmul.f32 %v693, %v579
      %v712 = vmul.f32 %v695, %v580
      %v713 = vadd.f32 %v697, %v699
      %v714 = vrot.slane %v713, 4
      %v715 = vadd.f32 %v713, %v714
      %v716 = vrot.slane %v715, 2
      %v717 = vadd.f32 %v715, %v716
      %v718 = vrot.slane %v717, 1
      %v719 = vadd.f32 %v717, %v718
      %v720 = vadd.f32 %v698, %v700
      %v721 = vrot.slane %v720, 4
      %v722 = vadd.f32 %v720, %v721
      %v723 = vrot.slane %v722, 2
      %v724 = vadd.f32 %v722, %v723
      %v725 = vrot.slane %v724, 1
      %v726 = vadd.f32 %v724, %v725
      %v727 = vadd.f32 %v701, %v703
      %v728 = vrot.slane %v727, 4
      %v729 = vadd.f32 %v727, %v728
      %v730 = vrot.slane %v729, 2
      %v731 = vadd.f32 %v729, %v730
      %v732 = vrot.slane %v731, 1
      %v733 = vadd.f32 %v731, %v732
      %v734 = vadd.f32 %v702, %v704
      %v735 = vrot.slane %v734, 4
      %v736 = vadd.f32 %v734, %v735
      %v737 = vrot.slane %v736, 2
      %v738 = vadd.f32 %v736, %v737
      %v739 = vrot.slane %v738, 1
      %v740 = vadd.f32 %v738, %v739
      %v741 = vadd.f32 %v705, %v707
      %v742 = vrot.slane %v741, 4
      %v743 = vadd.f32 %v741, %v742
      %v744 = vrot.slane %v743, 2
      %v745 = vadd.f32 %v743, %v744
      %v746 = vrot.slane %v745, 1
      %v747 = vadd.f32 %v745, %v746
      %v748 = vadd.f32 %v706, %v708
      %v749 = vrot.slane %v748, 4
      %v750 = vadd.f32 %v748, %v749
      %v751 = vrot.slane %v750, 2
      %v752 = vadd.f32 %v750, %v751
      %v753 = vrot.slane %v752, 1
      %v754 = vadd.f32 %v752, %v753
      %v755 = vadd.f32 %v709, %v711
      %v756 = vrot.slane %v755, 4
      %v757 = vadd.f32 %v755, %v756
      %v758 = vrot.slane %v757, 2
      %v759 = vadd.f32 %v757, %v758
      %v760 = vrot.slane %v759, 1
      %v761 = vadd.f32 %v759, %v760
      %v762 = vadd.f32 %v710, %v712
      %v763 = vrot.slane %v762, 4
      %v764 = vadd.f32 %v762, %v763
      %v765 = vrot.slane %v764, 2
      %v766 = vadd.f32 %v764, %v765
      %v767 = vrot.slane %v766, 1
      %v768 = vadd.f32 %v766, %v767
      %vm777 = vcmask 1041409
      %v778 = vsel %vm777, %v733, %v719
      %vm779 = vcmask 1042434
      %v780 = vsel %vm779, %v747, %v778
      %vm781 = vcmask 1043459
      %v782 = vsel %vm781, %v761, %v780
      %v783 = vsel %vm777, %v740, %v726
      %v784 = vsel %vm779, %v754, %v783
      %v785 = vsel %vm781, %v768, %v784
      %788 = vrot.lane.b32.xlu0 %v782, 17
      %v789 = vpop.permute.xlu0 %788
      %790 = vrot.lane.b32.xlu0 %v785, 17
      %v791 = vpop.permute.xlu0 %790
      %v792 = vsel %vm316, %v789, %v791
      %v793 = vsel %vm316, %v791, %v789
      %v794 = vmul.f32 %v793, %v322
      %v795 = vmul.f32 %v792, %v326
      %796 = vrot.lane.b32.xlu0 %v782, 16
      %v797 = vpop.permute.xlu0 %796
      %798 = vrot.lane.b32.xlu0 %v785, 16
      %v799 = vpop.permute.xlu0 %798
      %v800 = vsel %vm333, %v797, %v799
      %v801 = vsel %vm333, %v799, %v797
      %v802 = vmul.f32 %v801, %v339
      %v803 = vmul.f32 %v800, %v343
      %804 = vrot.lane.b32.xlu0 %v782, 15
      %v805 = vpop.permute.xlu0 %804
      %806 = vrot.lane.b32.xlu0 %v785, 15
      %v807 = vpop.permute.xlu0 %806
      %v808 = vsel %vm350, %v805, %v807
      %v809 = vsel %vm350, %v807, %v805
      %v810 = vmul.f32 %v809, %v356
      %v811 = vmul.f32 %v808, %v360
      %812 = vrot.lane.b32.xlu0 %v782, 1
      %v813 = vpop.permute.xlu0 %812
      %814 = vrot.lane.b32.xlu0 %v785, 1
      %v815 = vpop.permute.xlu0 %814
      %v816 = vsel %vm367, %v813, %v815
      %v817 = vsel %vm367, %v815, %v813
      %v818 = vmul.f32 %v817, %v373
      %v819 = vmul.f32 %v816, %v377
      %v820 = vmul.f32 %v719, %v383
      %v821 = vmul.f32 %v726, %v387
      %v822 = vmul.f32 %v733, %v383
      %v823 = vmul.f32 %v740, %v387
      %v824 = vmul.f32 %v747, %v383
      %v825 = vmul.f32 %v754, %v387
      %v826 = vmul.f32 %v761, %v383
      %v827 = vmul.f32 %v768, %v387
      %828 = vrot.lane.b32.xlu0 %v782, 127
      %v829 = vpop.permute.xlu0 %828
      %830 = vrot.lane.b32.xlu0 %v785, 127
      %v831 = vpop.permute.xlu0 %830
      %v832 = vsel %vm394, %v829, %v831
      %v833 = vsel %vm394, %v831, %v829
      %v834 = vmul.f32 %v832, %v400
      %v835 = vmul.f32 %v833, %v404
      %836 = vrot.lane.b32.xlu0 %v782, 113
      %v837 = vpop.permute.xlu0 %836
      %838 = vrot.lane.b32.xlu0 %v785, 113
      %v839 = vpop.permute.xlu0 %838
      %v840 = vsel %vm411, %v837, %v839
      %v841 = vsel %vm411, %v839, %v837
      %v842 = vmul.f32 %v840, %v417
      %v843 = vmul.f32 %v841, %v421
      %844 = vrot.lane.b32.xlu0 %v782, 112
      %v845 = vpop.permute.xlu0 %844
      %846 = vrot.lane.b32.xlu0 %v785, 112
      %v847 = vpop.permute.xlu0 %846
      %v848 = vsel %vm428, %v845, %v847
      %v849 = vsel %vm428, %v847, %v845
      %v850 = vmul.f32 %v848, %v434
      %v851 = vmul.f32 %v849, %v438
      %852 = vrot.lane.b32.xlu0 %v782, 111
      %v853 = vpop.permute.xlu0 %852
      %854 = vrot.lane.b32.xlu0 %v785, 111
      %v855 = vpop.permute.xlu0 %854
      %v856 = vsel %vm445, %v853, %v855
      %v857 = vsel %vm445, %v855, %v853
      %v858 = vmul.f32 %v856, %v451
      %v859 = vmul.f32 %v857, %v455
      %v862 = vrot.slane %v802, 4
      %v863 = vrot.slane %v803, 4
      %v868 = vrot.slane %v818, 4
      %v869 = vrot.slane %v819, 4
      %v880 = vrot.slane %v822, 7
      %v881 = vsel %vm777, %v880, %v820
      %v882 = vrot.slane %v824, 6
      %v883 = vsel %vm779, %v882, %v881
      %v884 = vrot.slane %v826, 5
      %v885 = vsel %vm781, %v884, %v883
      %v886 = vrot.slane %v823, 7
      %v887 = vsel %vm777, %v886, %v821
      %v888 = vrot.slane %v825, 6
      %v889 = vsel %vm779, %v888, %v887
      %v890 = vrot.slane %v827, 5
      %v891 = vsel %vm781, %v890, %v889
      %v896 = vrot.slane %v834, 4
      %v897 = vrot.slane %v835, 4
      %v902 = vrot.slane %v850, 4
      %v903 = vrot.slane %v851, 4
      %v906 = vsel %vm472, %v794, %v862
      %v907 = vsel %vm472, %v795, %v863
      %v908 = vsel %vm472, %v810, %v868
      %v909 = vsel %vm472, %v811, %v869
      %v910 = vsel %vm472, %v885, %v896
      %v911 = vsel %vm472, %v891, %v897
      %v912 = vsel %vm472, %v842, %v902
      %v913 = vsel %vm472, %v843, %v903
      %v914 = vpack.c.bf16 %v908, %v906
      %v915 = vpack.c.bf16 %v909, %v907
      %v916 = vpack.c.bf16 %v912, %v910
      %v917 = vpack.c.bf16 %v913, %v911
      %v918 = vpack.c.bf16 %v858, %v858
      %v919 = vpack.c.bf16 %v859, %v859
      %vm920 = vcmask 293888
      %v922 = vsel %vm920, %v279, 0
      %vm924 = vcmask 1041408
      %v926 = vsel %vm924, %v918, 0
      %v929 = vsel %vm924, %v919, 0
      %931 = vmatprep.subr.bf16.mxu0 %v915
      %932 = vmatpush1.bf16.msra.mxu0 %v914
      %933 = vmatprep.subr.bf16.mxu0 %v917
      %934 = vmatpush1.bf16.msra.mxu0 %v916
      %935 = vmatprep.subr.bf16.mxu0 %v929
      %936 = vmatpush1.bf16.msra.mxu0 %v926
      %937 = vmatprep.subr.bf16.mxu0 0
      %938 = vmatpush1.bf16.msra.mxu0 0
      %939 = vmatprep.subr.bf16.mxu0 0
      %940 = vmatpush1.bf16.msra.mxu0 0
      %941 = vmatprep.subr.bf16.mxu0 0
      %942 = vmatpush1.bf16.msra.mxu0 0
      %943 = vmatprep.subr.bf16.mxu0 0
      %944 = vmatpush1.bf16.msra.mxu0 0
      %945 = vmatprep.subr.bf16.mxu0 0
      %946 = vmatpush1.bf16.msra.mxu0 0
      %947 = vmatprep.subr.bf16.mxu0 0
      %948 = vmatpush1.bf16.msra.mxu0 0
      %949 = vmatprep.subr.bf16.mxu0 0
      %950 = vmatpush1.bf16.msra.mxu0 0
      %951 = vmatprep.subr.bf16.mxu0 0
      %952 = vmatpush1.bf16.msra.mxu0 0
      %953 = vmatprep.subr.bf16.mxu0 0
      %954 = vmatpush1.bf16.msra.mxu0 0
      %955 = vmatprep.subr.bf16.mxu0 0
      %956 = vmatpush1.bf16.msra.mxu0 0
      %957 = vmatprep.subr.bf16.mxu0 0
      %958 = vmatpush1.bf16.msra.mxu0 0
      %959 = vmatprep.subr.bf16.mxu0 0
      %960 = vmatpush1.bf16.msra.mxu0 0
      %961 = vmatprep.subr.bf16.mxu0 0
      %962 = vmatpush1.bf16.msra.mxu0 0
      %963 = vmatprep.mubr.bf16.mxu0 0
      %964 = vmatmul.mubr.bf16.gmra.mrb[0].mxu0 %v922
      %v965 = vpop.f32.mrb[0].mxu0
      %v966 = vadd.f32 0.0, %v965
      %v967 = vpop.f32.mrb[0].mxu0
      %v968 = vadd.f32 0.0, %v967
      %v969 = vpop.f32.mrb[0].mxu0
      %v970 = vpop.f32.mrb[0].mxu0
      %971 = vdwg.mxu0
      %v973 = vsel %vm468, %v278, 0
      %975 = vmatprep.subr.bf16.mxu0 %v459
      %976 = vmatpush1.bf16.msra.mxu0 %v458
      %977 = vmatprep.subr.bf16.mxu0 %v461
      %978 = vmatpush1.bf16.msra.mxu0 %v460
      %979 = vmatprep.subr.bf16.mxu0 %v463
      %980 = vmatpush1.bf16.msra.mxu0 %v462
      %981 = vmatprep.subr.bf16.mxu0 %v465
      %982 = vmatpush1.bf16.msra.mxu0 %v464
      %983 = vmatprep.subr.bf16.mxu0 %v477
      %984 = vmatpush1.bf16.msra.mxu0 %v474
      %985 = vmatprep.subr.bf16.mxu0 0
      %986 = vmatpush1.bf16.msra.mxu0 0
      %987 = vmatprep.subr.bf16.mxu0 0
      %988 = vmatpush1.bf16.msra.mxu0 0
      %989 = vmatprep.subr.bf16.mxu0 0
      %990 = vmatpush1.bf16.msra.mxu0 0
      %991 = vmatprep.subr.bf16.mxu0 0
      %992 = vmatpush1.bf16.msra.mxu0 0
      %993 = vmatprep.subr.bf16.mxu0 0
      %994 = vmatpush1.bf16.msra.mxu0 0
      %995 = vmatprep.subr.bf16.mxu0 0
      %996 = vmatpush1.bf16.msra.mxu0 0
      %997 = vmatprep.subr.bf16.mxu0 0
      %998 = vmatpush1.bf16.msra.mxu0 0
      %999 = vmatprep.subr.bf16.mxu0 0
      %1000 = vmatpush1.bf16.msra.mxu0 0
      %1001 = vmatprep.subr.bf16.mxu0 0
      %1002 = vmatpush1.bf16.msra.mxu0 0
      %1003 = vmatprep.subr.bf16.mxu0 0
      %1004 = vmatpush1.bf16.msra.mxu0 0
      %1005 = vmatprep.subr.bf16.mxu0 0
      %1006 = vmatpush1.bf16.msra.mxu0 0
      %1007 = vmatprep.mubr.bf16.mxu0 0
      %1008 = vmatmul.mubr.bf16.gmra.mrb[0].mxu0 %v973
      %v1009 = vpop.f32.mrb[0].mxu0
      %v1010 = vadd.f32 %v966, %v1009
      %v1011 = vpop.f32.mrb[0].mxu0
      %v1012 = vadd.f32 %v968, %v1011
      %v1013 = vpop.f32.mrb[0].mxu0
      %v1014 = vpop.f32.mrb[0].mxu0
      %1015 = vdwg.mxu0
      %v1016 = vtanh.pop %v1010
      %v1017 = vtanh.pop %v1012
      %v1018 = vxor.u32 %v1010, 2147483648
      %v1019 = vxor.u32 %v1012, 2147483648
      %v1020 = vmul.f32 %v1018, 1.442695
      %v1021 = vpow.pop %v1020
      %v1022 = vmul.f32 %v1019, 1.442695
      %v1023 = vpow.pop %v1022
      %v1024 = vadd.f32 %v1021, 1.0
      %v1025 = vadd.f32 %v1023, 1.0
      %v1026 = vrcp.pop %v1024
      %v1027 = vmul.f32 1.0, %v1026
      %v1028 = vrcp.pop %v1025
      %v1029 = vmul.f32 1.0, %v1028
      %v1030 = vmul.f32 %v1027, %v761
      %v1031 = vmul.f32 %v1029, %v768
      %v1032 = vlaneseq
      %v1033 = vshrl.u32 %v1032, 7
      %v1034 = vsub.s32 3, %v1033
      %v1035 = vrot.slane %v1030, %v1034
      %v1036 = vlaneseq
      %v1037 = vshrl.u32 %v1036, 7
      %v1038 = vsub.s32 3, %v1037
      %v1039 = vrot.slane %v1031, %v1038
      %v1040 = vmul.f32 %v719, %v1035
      %v1041 = vmul.f32 %v726, %v1039
      %v1042 = vmul.f32 %v733, %v1035
      %v1043 = vmul.f32 %v740, %v1039
      %v1044 = vmul.f32 %v747, %v1035
      %v1045 = vmul.f32 %v754, %v1039
      %v1046 = vsub.f32 1.0, %v1030
      %v1047 = vsub.f32 1.0, %v1031
      %v1048 = vlaneseq
      %v1049 = vshrl.u32 %v1048, 7
      %v1050 = vsub.s32 3, %v1049
      %v1051 = vrot.slane %v1046, %v1050
      %v1052 = vlaneseq
      %v1053 = vshrl.u32 %v1052, 7
      %v1054 = vsub.s32 3, %v1053
      %v1055 = vrot.slane %v1047, %v1054
      %v1056 = vmul.f32 %v1016, %v1051
      %v1057 = vmul.f32 %v1017, %v1055
      %v1060 = vrot.slane %v1056, 1
      %v1061 = vrot.slane %v1057, 1
      %v1062 = vrot.slane %v1056, 2
      %v1063 = vrot.slane %v1057, 2
      %v1070 = vadd.f32 %v1040, %v1056
      %v1071 = vadd.f32 %v1041, %v1057
      %v1072 = vadd.f32 %v1042, %v1060
      %v1073 = vadd.f32 %v1043, %v1061
      %v1074 = vadd.f32 %v1044, %v1062
      %v1075 = vadd.f32 %v1045, %v1063
      %v1082 = vcombine.low %v1070, %v1071
      %v1083 = vcombine.low %v1072, %v1073
      %v1084 = vcombine.low %v1074, %v1075
      %v1085 = vrot.slane %v1083, 7
      %v1086 = vsel %vm777, %v1085, %v1082
      %vm1087 = vcmask 1045509
      %v1088 = vsel %vm1087, %v1085, %v1086
      %v1089 = vrot.slane %v1084, 6
      %v1090 = vsel %vm779, %v1089, %v1088
      %vm1091 = vcmask 1046534
      %v1092 = vsel %vm1091, %v1089, %v1090
      %1094 = vst [vmem:[%s271] sm:$0x77] %v1092
      %p1095 = scmp.lt.s32.totalorder %s17, 1
      %s1096 = scalar_select %p1095, %s17, 1
      %s1097 = smul.addr %s1096, 2
      %s1098 = smul.addr %s1097, 4
      %s1099 = scalar_lea.vmem %s6, %s1098
      // Predicated region
      $region45: #{afwnet_forward.1} parent=43 // pred_check
        %p1100 = pneg %p171
      $region46: #{afwnet_forward.1} parent=43 // pred_check_branch
        %1102 = sbr.rel (%p1100) target = $region48
      $region47: #{afwnet_forward.1} parent=43 // pred_region
        _
      $region48: #{afwnet_forward.1} parent=43 // pred_fallthru
        _
    $region44: #{afwnet_forward.1} parent=5 // pred_fallthru
      _
    %p1103 = scmp.le.s32.totalorder 2, %s12
    // Predicated region
    $region49: #{afwnet_forward.1} parent=5 // pred_check
      %p1104 = pneg %p1103
    $region50: #{afwnet_forward.1} parent=5 // pred_check_branch
      %1106 = sbr.rel (%p1104) target = $region52
    $region51: #{afwnet_forward.1} parent=5 // pred_region
      %s1107 = ssub.s32 %s12, 2
      // Predicated region
      $region53: #{afwnet_forward.1} parent=51 // pred_check
        %p1108 = pneg %p177
      $region54: #{afwnet_forward.1} parent=51 // pred_check_branch
        %1110 = sbr.rel (%p1108) target = $region56
      $region55: #{afwnet_forward.1} parent=51 // pred_region
        %p1111 = scmp.lt.s32.totalorder %s18, 1
        %s1112 = scalar_select %p1111, %s18, 1
        %s1113 = smul.addr %s1112, 2
        %s1114 = smul.addr %s1113, 4
        %s1115 = scalar_lea.vmem %s6, %s1114
      $region56: #{afwnet_forward.1} parent=51 // pred_fallthru
        _
    $region52: #{afwnet_forward.1} parent=5 // pred_fallthru
      _
  $region6: #{afwnet_forward.1} parent=0 // loop_footer
    %s16 = sadd.s32 1, %s12
  $region7: #{afwnet_forward.1} parent=0 // loop_footer_branch
    %11 = sbr.rel target = $region3
  $region8: #{afwnet_forward.1} parent=0 // loop_exit
    _

</llo_original>
